<compile_context>
chip_gen: v7x
topology: tpu7x:2x2x1
jax: 0.10.0
libtpu: 0.0.40
codegen_flags: <defaults>
</compile_context>

<pallas_src>
import functools
import math

import jax
import jax.numpy as jnp
from jax.experimental import pallas as pl
from jax.experimental.pallas import tpu as pltpu

LN_EPS = 1e-5  # nn.LayerNorm default eps
_INV_SQRT2 = 1.0 / math.sqrt(2.0)


def _round_up(x, m):
    return (x + m - 1) // m * m


def _usable_vmem_bytes():
    """~75% of per-core physical VMEM: ~96 MiB on v5e/v6e, ~48 MiB on v7x."""
    try:
        cap = int(pltpu.get_tpu_info().vmem_capacity_bytes)
    except (AttributeError, NotImplementedError, RuntimeError, ValueError, TypeError):
        cap = 64 * 1024 * 1024  # conservative fallback (v7x-sized)
    cap = max(cap, 16 * 1024 * 1024)
    return (cap * 3) // 4


_BUFFERED_SUPPORT = None


def _pipeline_mode_supported():
    """One-time feature probe: does this jax build accept pipeline_mode=pl.Buffered(1)?

    The probe is an isolated tiny kernel, so the real kernel build path has no
    try/except around it and the VMEM estimate can be made honest either way.
    """
    global _BUFFERED_SUPPORT
    if _BUFFERED_SUPPORT is not None:
        return _BUFFERED_SUPPORT
    if not hasattr(pl, "Buffered"):
        _BUFFERED_SUPPORT = False
        return False

    def _copy(x_ref, o_ref):
        o_ref[...] = x_ref[...]

    try:
        probe = pl.pallas_call(
            _copy,
            out_shape=jax.ShapeDtypeStruct((8, 128), jnp.float32),
            grid=(1,),
            in_specs=[pl.BlockSpec((8, 128), lambda i: (0, 0),
                                   pipeline_mode=pl.Buffered(1))],
            out_specs=pl.BlockSpec((8, 128), lambda i: (0, 0)),
        )
        jax.block_until_ready(probe(jnp.zeros((8, 128), jnp.float32)))
        _BUFFERED_SUPPORT = True
    except Exception:  # feature probe only: any failure => feature disabled
        _BUFFERED_SUPPORT = False
    return _BUFFERED_SUPPORT


def _channel_mixing_kernel(u_ref, gamma_ref, beta_ref, mask_ref,
                           w3_ref, b3_ref, w4_ref, b4_ref,
                           o_ref, z_scr, acc_scr, *,
                           c_real, use_mask, approximate_gelu):
    """Grid = (row_blocks, h_blocks); hidden axis is the (innermost) reduction."""
    j = pl.program_id(1)

    @pl.when(j == 0)
    def _():
        # ---- LayerNorm over the real channel axis (padded lanes are zero) ----
        u = u_ref[...].astype(jnp.float32)
        inv_c = 1.0 / c_real
        mean = jnp.sum(u, axis=-1, keepdims=True) * inv_c      # pads contribute 0
        d = u - mean
        if use_mask:
            d = d * mask_ref[...]                              # zero the pad lanes
        var = jnp.sum(d * d, axis=-1, keepdims=True) * inv_c   # biased var (PyTorch)
        z = d * jax.lax.rsqrt(var + LN_EPS)
        z = z * gamma_ref[...] + beta_ref[...]                 # padded lanes -> 0
        z_scr[...] = z.astype(z_scr.dtype)
        # residual + mlp4 bias folded into the f32 accumulator once.
        acc_scr[...] = u + b4_ref[...]

    # ---- mlp3 block: (tm, C) @ (C, H_blk) on the MXU ----
    h = jnp.dot(z_scr[...], w3_ref[...],
                preferred_element_type=jnp.float32) + b3_ref[...]

    # ---- GELU (exact erf by default, matching nn.GELU()) ----
    if approximate_gelu:
        h = jax.nn.gelu(h, approximate=True)                   # tanh -> EUP slot
    else:
        h = 0.5 * h * (1.0 + jax.lax.erf(h * _INV_SQRT2))

    # ---- mlp4 block accumulation: (tm, H_blk) @ (H_blk, C) ----
    acc_scr[...] += jnp.dot(h.astype(w4_ref.dtype), w4_ref[...],
                            preferred_element_type=jnp.float32)

    @pl.when(j == pl.num_programs(1) - 1)
    def _():
        # dropout: eval-mode identity; residual already folded into acc.
        o_ref[...] = acc_scr[...].astype(o_ref.dtype)


def channel_mixing_mlp(U, gamma, beta, w3, b3, w4, b4, *,
                       tile_rows=512,
                       h_block=None,
                       matmul_dtype=jnp.bfloat16,
                       approximate_gelu=False,
                       vmem_budget_bytes=None):
    """U: [B, T, C].  w3: [C, H], w4: [H, C] (transposed from PyTorch (out, in)).

    Returns [B, T, C] = U + Dropout_eval(W4 @ gelu(W3 @ LN(U))).
    """
    B, T, C = U.shape
    H = w3.shape[1]
    assert w3.shape == (C, H) and w4.shape == (H, C)
    assert b3.shape == (H,) and b4.shape == (C,)

    rows = B * T
    C_pad = _round_up(C, 128)          # lane-dense last dim: unmasked stores, MXU K
    H_pad = _round_up(H, 128)
    w_itemsize = jnp.dtype(matmul_dtype).itemsize
    io_itemsize = jnp.dtype(U.dtype).itemsize

    usable = _usable_vmem_bytes()
    budget = usable if vmem_budget_bytes is None else int(vmem_budget_bytes)
    has_buffered = _pipeline_mode_supported()

    # ---- row tile: as large as budget allows, but keep >= 2 row steps so the
    #      "parallel" axis can shard across v7x's two TensorCores. ----
    tm = min(_round_up(tile_rows, 8), _round_up(rows, 8))
    if rows > 8:
        tm = min(tm, _round_up(pl.cdiv(rows, 2), 8))

    def _h_blk(nh_):
        return _round_up(pl.cdiv(H_pad, nh_), 128)

    def _w_bufs(nh_):
        # grid-invariant weight blocks (nh == 1) are single-buffered if supported;
        # otherwise (or when streaming H blocks) they are double-buffered.
        return 1 if (nh_ == 1 and has_buffered) else 2

    def _vmem_estimate(tm_, nh_):
        hb = _h_blk(nh_)
        wb = _w_bufs(nh_)
        small_bufs = 1 if has_buffered else 2
        io = 2 * 2 * tm_ * C_pad * io_itemsize                 # dbl-buffered U + out
        weights = wb * (2 * C_pad * hb * w_itemsize + hb * 4)  # W3, W4 blocks + b3
        small = small_bufs * 4 * C_pad * 4                     # gamma, beta, mask, b4
        scratch = tm_ * C_pad * (w_itemsize + 4)               # z cache + f32 acc
        tmp = 2 * tm_ * hb * 4                                 # live h temporaries
        return io + weights + small + scratch + tmp

    # Prefer splitting the hidden axis (keeps the MXU M-pass / row tile large)
    # before shrinking the row tile -- the right trade on v7x's 64 MiB VMEM.
    if h_block is not None:
        nh = max(1, pl.cdiv(H_pad, _round_up(h_block, 128)))
    else:
        nh = 1
        while _vmem_estimate(tm, nh) > budget and _h_blk(nh) > 128:
            nh *= 2
    while _vmem_estimate(tm, nh) > budget and tm > 8:
        tm = max(8, _round_up(tm // 2, 8))

    H_blk = _h_blk(nh)
    H_tot = H_blk * nh                 # zero-padded hidden width (exact no-op)
    rows_pad = _round_up(rows, tm)
    grid = (rows_pad // tm, nh)

    # ---- operand padding; zero pads are exact no-ops through the pipeline ----
    pad_rows = rows_pad - rows
    pad_c = C_pad - C
    u2 = U.reshape(rows, C)
    if pad_rows or pad_c:              # skip the extra HBM pass when aligned
        u2 = jnp.pad(u2, ((0, pad_rows), (0, pad_c)))

    f32 = jnp.float32
    gamma2 = jnp.pad(gamma.astype(f32), (0, pad_c)).reshape(1, C_pad)
    beta2 = jnp.pad(beta.astype(f32), (0, pad_c)).reshape(1, C_pad)
    b4p = jnp.pad(b4.astype(f32), (0, pad_c)).reshape(1, C_pad)
    mask = (jnp.arange(C_pad) < C).astype(f32).reshape(1, C_pad)
    w3p = jnp.pad(w3, ((0, pad_c), (0, H_tot - H))).astype(matmul_dtype)
    b3p = jnp.pad(b3.astype(f32), (0, H_tot - H)).reshape(1, H_tot)
    w4p = jnp.pad(w4, ((0, H_tot - H), (0, pad_c))).astype(matmul_dtype)

    kernel = functools.partial(_channel_mixing_kernel, c_real=C,
                               use_mask=(pad_c != 0),
                               approximate_gelu=approximate_gelu)

    def _spec(shape, index_map, *, single_buffer=False):
        if single_buffer and has_buffered:
            return pl.BlockSpec(shape, index_map, pipeline_mode=pl.Buffered(1))
        return pl.BlockSpec(shape, index_map)

    const = lambda i, j: (0, 0)
    weights_const = (nh == 1)

    in_specs = [
        pl.BlockSpec((tm, C_pad), lambda i, j: (i, 0)),                       # U rows
        _spec((1, C_pad), const, single_buffer=True),                         # gamma
        _spec((1, C_pad), const, single_buffer=True),                         # beta
        _spec((1, C_pad), const, single_buffer=True),                         # pad mask
        _spec((C_pad, H_blk), lambda i, j: (0, j), single_buffer=weights_const),  # W3
        _spec((1, H_blk), lambda i, j: (0, j), single_buffer=weights_const),      # b3
        _spec((H_blk, C_pad), lambda i, j: (j, 0), single_buffer=weights_const),  # W4
        _spec((1, C_pad), const, single_buffer=True),                         # b4
    ]
    out_spec = pl.BlockSpec((tm, C_pad), lambda i, j: (i, 0))

    est = _vmem_estimate(tm, nh)
    vmem_limit = int(min(usable, max(2 * est, 32 * 1024 * 1024)))
    vmem_limit = max(vmem_limit, est)

    grid_rows = rows_pad // tm
    cost = pl.CostEstimate(
        flops=int(4 * rows_pad * C_pad * H_tot),
        transcendentals=int(rows_pad * H_tot),
        bytes_accessed=int(2 * rows_pad * C_pad * io_itemsize
                           + grid_rows * 2 * C_pad * H_tot * w_itemsize),
    )

    out = pl.pallas_call(
        kernel,
        out_shape=jax.ShapeDtypeStruct((rows_pad, C_pad), U.dtype),
        grid=grid,
        in_specs=in_specs,
        out_specs=out_spec,
        scratch_shapes=[pltpu.VMEM((tm, C_pad), matmul_dtype),   # z = LN(U) cache
                        pltpu.VMEM((tm, C_pad), jnp.float32)],   # f32 accumulator
        compiler_params=pltpu.CompilerParams(
            dimension_semantics=("parallel", "arbitrary"),
            vmem_limit_bytes=vmem_limit),
        cost_estimate=cost,
    )(u2, gamma2, beta2, mask, w3p, b3p, w4p, b4p)

    if pad_rows or pad_c:
        out = out[:rows, :C]
    return out.reshape(B, T, C)


def _reference(U, gamma, beta, w3, b3, w4, b4):
    u = U.astype(jnp.float32)
    mean = jnp.mean(u, axis=-1, keepdims=True)
    var = jnp.mean(jnp.square(u - mean), axis=-1, keepdims=True)
    z = (u - mean) / jnp.sqrt(var + LN_EPS) * gamma + beta
    h = z @ w3 + b3
    h = 0.5 * h * (1.0 + jax.lax.erf(h * _INV_SQRT2))
    y = h @ w4 + b4
    return (u + y).astype(U.dtype)


if __name__ == "__main__":
    # Module hyperparameters (small, consistent with the forward):
    B, n_tokens, n_channel, n_hidden = 2, 8, 32, 64

    key = jax.random.PRNGKey(0)
    k_u, k_w3, k_b3, k_w4, k_b4 = jax.random.split(key, 5)

    U = jax.random.normal(k_u, (B, n_tokens, n_channel), dtype=jnp.float32)

    # LayerNorm params (PyTorch init: gamma=1, beta=0)
    gamma = jnp.ones((n_channel,), jnp.float32)
    beta = jnp.zeros((n_channel,), jnp.float32)

    # Linear params; PyTorch weight is (out, in) -> we store (in, out) for x @ W.
    lim3 = 1.0 / math.sqrt(n_channel)
    w3 = jax.random.uniform(k_w3, (n_channel, n_hidden), jnp.float32, -lim3, lim3)
    b3 = jax.random.uniform(k_b3, (n_hidden,), jnp.float32, -lim3, lim3)
    lim4 = 1.0 / math.sqrt(n_hidden)
    w4 = jax.random.uniform(k_w4, (n_hidden, n_channel), jnp.float32, -lim4, lim4)
    b4 = jax.random.uniform(k_b4, (n_channel,), jnp.float32, -lim4, lim4)

    ref = _reference(U, gamma, beta, w3, b3, w4, b4)

    # 1) Exact-numerics path (f32 matmul operands, exact erf GELU).
    out_f32 = channel_mixing_mlp(U, gamma, beta, w3, b3, w4, b4,
                                 matmul_dtype=jnp.float32)
    out_f32 = jax.block_until_ready(out_f32)
    assert out_f32.shape == U.shape and out_f32.dtype == U.dtype
    assert jnp.allclose(out_f32, ref, atol=1e-4, rtol=1e-4), "f32 mismatch"

    # 2) Hidden-axis split (accumulator) path, still f32-exact.
    H2 = 256
    k_w3b, k_w4b = jax.random.split(k_w3, 2)
    w3b = jax.random.uniform(k_w3b, (n_channel, H2), jnp.float32, -lim3, lim3)
    b3b = jax.random.uniform(k_b3, (H2,), jnp.float32, -lim3, lim3)
    limb = 1.0 / math.sqrt(H2)
    w4b = jax.random.uniform(k_w4b, (H2, n_channel), jnp.float32, -limb, limb)
    ref2 = _reference(U, gamma, beta, w3b, b3b, w4b, b4)
    out_split = channel_mixing_mlp(U, gamma, beta, w3b, b3b, w4b, b4,
                                   matmul_dtype=jnp.float32, h_block=128)
    out_split = jax.block_until_ready(out_split)
    assert jnp.allclose(out_split, ref2, atol=1e-4, rtol=1e-4), "H-split mismatch"

    # 3) Performance default (bf16 matmul operands) -> loose check.
    out_bf16 = channel_mixing_mlp(U, gamma, beta, w3, b3, w4, b4)
    out_bf16 = jax.block_until_ready(out_bf16)
    assert out_bf16.shape == U.shape and out_bf16.dtype == U.dtype
    assert jnp.allclose(out_bf16, ref, atol=5e-2, rtol=5e-2), "bf16 mismatch"

    print("KERNEL_OK")
</pallas_src>

<mosaic_0001>
module attributes {stable_mosaic.version = 11 : i64} {
  func.func @_copy(%arg0: i32, %arg1: memref<8x128xf32, #tpu.memory_space<vmem>>, %arg2: memref<8x128xf32, #tpu.memory_space<vmem>>) attributes {dimension_semantics = [#tpu.dimension_semantics<arbitrary>], iteration_bounds = array<i64: 1>, scalar_prefetch = 0 : i64, scratch_operands = 0 : i64, tpu.core_type = #tpu.core_type<tc>, window_params = [{pipeline_mode = #tpu.pipeline_mode<synchronous>, transform_indices = @transform_0, window_bounds = array<i64: 8, 128>}, {pipeline_mode = #tpu.pipeline_mode<synchronous>, transform_indices = @transform_1, window_bounds = array<i64: 8, 128>}]} {
    %c0 = arith.constant 0 : index
    %c0_0 = arith.constant 0 : index
    %0 = vector.load %arg1[%c0, %c0_0] : memref<8x128xf32, #tpu.memory_space<vmem>>, vector<8x128xf32>
    %c0_1 = arith.constant 0 : index
    %c0_2 = arith.constant 0 : index
    %1 = vector.load %arg2[%c0_1, %c0_2] : memref<8x128xf32, #tpu.memory_space<vmem>>, vector<8x128xf32>
    tpu.vector_store %arg2[%c0_1, %c0_2], %0 {strides = array<i32>} : memref<8x128xf32, #tpu.memory_space<vmem>>, vector<8x128xf32>,
    return
  }
  func.func @transform_0(%arg0: i32) -> (i32, i32) {
    %c0_i32 = arith.constant 0 : i32
    %c0_i32_0 = arith.constant 0 : i32
    %c0_i32_1 = arith.constant 0 : i32
    return %c0_i32, %c0_i32_0 : i32, i32
  }
  func.func @transform_1(%arg0: i32) -> (i32, i32) {
    %c0_i32 = arith.constant 0 : i32
    %c0_i32_0 = arith.constant 0 : i32
    %c0_i32_1 = arith.constant 0 : i32
    return %c0_i32, %c0_i32_0 : i32, i32
  }
}

module attributes {stable_mosaic.version = 11 : i64} {
  func.func @_channel_mixing_kernel(%arg0: i32, %arg1: i32, %arg2: memref<8x128xf32, #tpu.memory_space<vmem>>, %arg3: memref<1x128xf32, #tpu.memory_space<vmem>>, %arg4: memref<1x128xf32, #tpu.memory_space<vmem>>, %arg5: memref<1x128xf32, #tpu.memory_space<vmem>>, %arg6: memref<128x128xf32, #tpu.memory_space<vmem>>, %arg7: memref<1x128xf32, #tpu.memory_space<vmem>>, %arg8: memref<128x128xf32, #tpu.memory_space<vmem>>, %arg9: memref<1x128xf32, #tpu.memory_space<vmem>>, %arg10: memref<8x128xf32, #tpu.memory_space<vmem>>, %arg11: memref<8x128xf32, #tpu.memory_space<vmem>>, %arg12: memref<8x128xf32, #tpu.memory_space<vmem>>) attributes {dimension_semantics = [#tpu.dimension_semantics<parallel>, #tpu.dimension_semantics<arbitrary>], iteration_bounds = array<i64: 2, 1>, scalar_prefetch = 0 : i64, scratch_operands = 2 : i64, tpu.core_type = #tpu.core_type<tc>, window_params = [{transform_indices = @transform_0, window_bounds = array<i64: 8, 128>}, {pipeline_mode = #tpu.pipeline_mode<synchronous>, transform_indices = @transform_1, window_bounds = array<i64: 1, 128>}, {pipeline_mode = #tpu.pipeline_mode<synchronous>, transform_indices = @transform_2, window_bounds = array<i64: 1, 128>}, {pipeline_mode = #tpu.pipeline_mode<synchronous>, transform_indices = @transform_3, window_bounds = array<i64: 1, 128>}, {transform_indices = @transform_4, window_bounds = array<i64: 128, 128>}, {transform_indices = @transform_5, window_bounds = array<i64: 1, 128>}, {transform_indices = @transform_6, window_bounds = array<i64: 128, 128>}, {pipeline_mode = #tpu.pipeline_mode<synchronous>, transform_indices = @transform_7, window_bounds = array<i64: 1, 128>}, {transform_indices = @transform_8, window_bounds = array<i64: 8, 128>}]} {
    %c0_i32 = arith.constant 0 : i32
    %0 = arith.cmpi eq, %arg1, %c0_i32 : i32
    %1 = arith.extui %0 : i1 to i32
    %c0_i32_0 = arith.constant 0 : i32
    %2 = arith.cmpi ne, %1, %c0_i32_0 : i32
    scf.if %2 {
      %c0_18 = arith.constant 0 : index
      %c0_19 = arith.constant 0 : index
      %25 = vector.load %arg2[%c0_18, %c0_19] : memref<8x128xf32, #tpu.memory_space<vmem>>, vector<8x128xf32>
      %cst_20 = arith.constant dense<0.000000e+00> : vector<8xf32>
      %26 = vector.multi_reduction <add>, %25, %cst_20 [1] : vector<8x128xf32> to vector<8xf32>
      %27 = vector.shape_cast %26 : vector<8xf32> to vector<8x1xf32>
      %cst_21 = arith.constant 3.125000e-02 : f32
      %28 = vector.broadcast %cst_21 : f32 to vector<8x1xf32>
      %29 = arith.mulf %27, %28 : vector<8x1xf32>
      %30 = vector.broadcast %29 : vector<8x1xf32> to vector<8x128xf32>
      %31 = arith.subf %25, %30 : vector<8x128xf32>
      %c0_22 = arith.constant 0 : index
      %c0_23 = arith.constant 0 : index
      %32 = vector.load %arg5[%c0_22, %c0_23] : memref<1x128xf32, #tpu.memory_space<vmem>>, vector<1x128xf32>
      %33 = vector.broadcast %32 : vector<1x128xf32> to vector<8x128xf32>
      %34 = arith.mulf %31, %33 : vector<8x128xf32>
      %35 = arith.mulf %34, %34 : vector<8x128xf32>
      %cst_24 = arith.constant dense<0.000000e+00> : vector<8xf32>
      %36 = vector.multi_reduction <add>, %35, %cst_24 [1] : vector<8x128xf32> to vector<8xf32>
      %37 = vector.shape_cast %36 : vector<8xf32> to vector<8x1xf32>
      %cst_25 = arith.constant 3.125000e-02 : f32
      %38 = vector.broadcast %cst_25 : f32 to vector<8x1xf32>
      %39 = arith.mulf %37, %38 : vector<8x1xf32>
      %cst_26 = arith.constant 9.99999974E-6 : f32
      %40 = vector.broadcast %cst_26 : f32 to vector<8x1xf32>
      %41 = arith.addf %39, %40 : vector<8x1xf32>
      %42 = math.rsqrt %41 : vector<8x1xf32>
      %43 = vector.broadcast %42 : vector<8x1xf32> to vector<8x128xf32>
      %44 = arith.mulf %34, %43 : vector<8x128xf32>
      %c0_27 = arith.constant 0 : index
      %c0_28 = arith.constant 0 : index
      %45 = vector.load %arg3[%c0_27, %c0_28] : memref<1x128xf32, #tpu.memory_space<vmem>>, vector<1x128xf32>
      %46 = vector.broadcast %45 : vector<1x128xf32> to vector<8x128xf32>
      %47 = arith.mulf %44, %46 : vector<8x128xf32>
      %c0_29 = arith.constant 0 : index
      %c0_30 = arith.constant 0 : index
      %48 = vector.load %arg4[%c0_29, %c0_30] : memref<1x128xf32, #tpu.memory_space<vmem>>, vector<1x128xf32>
      %49 = vector.broadcast %48 : vector<1x128xf32> to vector<8x128xf32>
      %50 = arith.addf %47, %49 : vector<8x128xf32>
      %c0_31 = arith.constant 0 : index
      %c0_32 = arith.constant 0 : index
      %51 = vector.load %arg11[%c0_31, %c0_32] : memref<8x128xf32, #tpu.memory_space<vmem>>, vector<8x128xf32>
      tpu.vector_store %arg11[%c0_31, %c0_32], %50 {strides = array<i32>} : memref<8x128xf32, #tpu.memory_space<vmem>>, vector<8x128xf32>,
      %c0_33 = arith.constant 0 : index
      %c0_34 = arith.constant 0 : index
      %52 = vector.load %arg9[%c0_33, %c0_34] : memref<1x128xf32, #tpu.memory_space<vmem>>, vector<1x128xf32>
      %53 = vector.broadcast %52 : vector<1x128xf32> to vector<8x128xf32>
      %54 = arith.addf %25, %53 : vector<8x128xf32>
      %c0_35 = arith.constant 0 : index
      %c0_36 = arith.constant 0 : index
      %55 = vector.load %arg12[%c0_35, %c0_36] : memref<8x128xf32, #tpu.memory_space<vmem>>, vector<8x128xf32>
      tpu.vector_store %arg12[%c0_35, %c0_36], %54 {strides = array<i32>} : memref<8x128xf32, #tpu.memory_space<vmem>>, vector<8x128xf32>,
    } else {
    }
    %c0 = arith.constant 0 : index
    %c0_1 = arith.constant 0 : index
    %3 = vector.load %arg11[%c0, %c0_1] : memref<8x128xf32, #tpu.memory_space<vmem>>, vector<8x128xf32>
    %c0_2 = arith.constant 0 : index
    %c0_3 = arith.constant 0 : index
    %4 = vector.load %arg6[%c0_2, %c0_3] : memref<128x128xf32, #tpu.memory_space<vmem>>, vector<128x128xf32>
    %cst = arith.constant dense<0.000000e+00> : vector<8x128xf32>
    %5 = tpu.matmul %3, %4, %cst {dimension_numbers = #tpu.dot_dimension_numbers<[1], [0], [0], [1], [0, 0, 1, 1], [], []>} : vector<8x128xf32>, vector<128x128xf32>, vector<8x128xf32> -> vector<8x128xf32>
    %c0_4 = arith.constant 0 : index
    %c0_5 = arith.constant 0 : index
    %6 = vector.load %arg7[%c0_4, %c0_5] : memref<1x128xf32, #tpu.memory_space<vmem>>, vector<1x128xf32>
    %7 = vector.broadcast %6 : vector<1x128xf32> to vector<8x128xf32>
    %8 = arith.addf %5, %7 : vector<8x128xf32>
    %cst_6 = arith.constant 5.000000e-01 : f32
    %9 = vector.broadcast %cst_6 : f32 to vector<8x128xf32>
    %10 = arith.mulf %9, %8 : vector<8x128xf32>
    %cst_7 = arith.constant 0.707106769 : f32
    %11 = vector.broadcast %cst_7 : f32 to vector<8x128xf32>
    %12 = arith.mulf %8, %11 : vector<8x128xf32>
    %13 = math.erf %12 : vector<8x128xf32>
    %cst_8 = arith.constant 1.000000e+00 : f32
    %14 = vector.broadcast %cst_8 : f32 to vector<8x128xf32>
    %15 = arith.addf %14, %13 : vector<8x128xf32>
    %16 = arith.mulf %10, %15 : vector<8x128xf32>
    %c0_9 = arith.constant 0 : index
    %c0_10 = arith.constant 0 : index
    %17 = vector.load %arg12[%c0_9, %c0_10] : memref<8x128xf32, #tpu.memory_space<vmem>>, vector<8x128xf32>
    %c0_11 = arith.constant 0 : index
    %c0_12 = arith.constant 0 : index
    %18 = vector.load %arg8[%c0_11, %c0_12] : memref<128x128xf32, #tpu.memory_space<vmem>>, vector<128x128xf32>
    %cst_13 = arith.constant dense<0.000000e+00> : vector<8x128xf32>
    %19 = tpu.matmul %16, %18, %cst_13 {dimension_numbers = #tpu.dot_dimension_numbers<[1], [0], [0], [1], [0, 0, 1, 1], [], []>} : vector<8x128xf32>, vector<128x128xf32>, vector<8x128xf32> -> vector<8x128xf32>
    %20 = arith.addf %17, %19 : vector<8x128xf32>
    %c0_14 = arith.constant 0 : index
    %c0_15 = arith.constant 0 : index
    %21 = vector.load %arg12[%c0_14, %c0_15] : memref<8x128xf32, #tpu.memory_space<vmem>>, vector<8x128xf32>
    tpu.vector_store %arg12[%c0_14, %c0_15], %20 {strides = array<i32>} : memref<8x128xf32, #tpu.memory_space<vmem>>, vector<8x128xf32>,
    %c0_i32_16 = arith.constant 0 : i32
    %22 = arith.cmpi eq, %arg1, %c0_i32_16 : i32
    %23 = arith.extui %22 : i1 to i32
    %c0_i32_17 = arith.constant 0 : i32
    %24 = arith.cmpi ne, %23, %c0_i32_17 : i32
    scf.if %24 {
      %c0_18 = arith.constant 0 : index
      %c0_19 = arith.constant 0 : index
      %25 = vector.load %arg12[%c0_18, %c0_19] : memref<8x128xf32, #tpu.memory_space<vmem>>, vector<8x128xf32>
      %c0_20 = arith.constant 0 : index
      %c0_21 = arith.constant 0 : index
      %26 = vector.load %arg10[%c0_20, %c0_21] : memref<8x128xf32, #tpu.memory_space<vmem>>, vector<8x128xf32>
      tpu.vector_store %arg10[%c0_20, %c0_21], %25 {strides = array<i32>} : memref<8x128xf32, #tpu.memory_space<vmem>>, vector<8x128xf32>,
    } else {
    }
    return
  }
  func.func @transform_0(%arg0: i32, %arg1: i32) -> (i32, i32) {
    %c0_i32 = arith.constant 0 : i32
    %c0_i32_0 = arith.constant 0 : i32
    return %arg0, %c0_i32 : i32, i32
  }
  func.func @transform_1(%arg0: i32, %arg1: i32) -> (i32, i32) {
    %c0_i32 = arith.constant 0 : i32
    %c0_i32_0 = arith.constant 0 : i32
    %c0_i32_1 = arith.constant 0 : i32
    return %c0_i32, %c0_i32_0 : i32, i32
  }
  func.func @transform_2(%arg0: i32, %arg1: i32) -> (i32, i32) {
    %c0_i32 = arith.constant 0 : i32
    %c0_i32_0 = arith.constant 0 : i32
    %c0_i32_1 = arith.constant 0 : i32
    return %c0_i32, %c0_i32_0 : i32, i32
  }
  func.func @transform_3(%arg0: i32, %arg1: i32) -> (i32, i32) {
    %c0_i32 = arith.constant 0 : i32
    %c0_i32_0 = arith.constant 0 : i32
    %c0_i32_1 = arith.constant 0 : i32
    return %c0_i32, %c0_i32_0 : i32, i32
  }
  func.func @transform_4(%arg0: i32, %arg1: i32) -> (i32, i32) {
    %c0_i32 = arith.constant 0 : i32
    %c0_i32_0 = arith.constant 0 : i32
    return %c0_i32, %arg1 : i32, i32
  }
  func.func @transform_5(%arg0: i32, %arg1: i32) -> (i32, i32) {
    %c0_i32 = arith.constant 0 : i32
    %c0_i32_0 = arith.constant 0 : i32
    return %c0_i32, %arg1 : i32, i32
  }
  func.func @transform_6(%arg0: i32, %arg1: i32) -> (i32, i32) {
    %c0_i32 = arith.constant 0 : i32
    %c0_i32_0 = arith.constant 0 : i32
    return %arg1, %c0_i32 : i32, i32
  }
  func.func @transform_7(%arg0: i32, %arg1: i32) -> (i32, i32) {
    %c0_i32 = arith.constant 0 : i32
    %c0_i32_0 = arith.constant 0 : i32
    %c0_i32_1 = arith.constant 0 : i32
    return %c0_i32, %c0_i32_0 : i32, i32
  }
  func.func @transform_8(%arg0: i32, %arg1: i32) -> (i32, i32) {
    %c0_i32 = arith.constant 0 : i32
    %c0_i32_0 = arith.constant 0 : i32
    return %arg0, %c0_i32 : i32, i32
  }
}

</mosaic_0001>

<llo_original>
// kernel: tpu_custom_call.1
$region0: #{tpu_custom_call.1}
  #allocation0 [shape = 'u32[]', space=smem, size = 0x4, offset = 0x4, fixed_abs, tag = 'smem constant byte address 0x4 - core index']
  #allocation1 [shape = 'u32[144,128]{1,0:T(1,128)}', space=vmem, size = 0x12000, scoped, tag = 'internal scratch']
  %s0 = inlined_call_operand.hbm [shape: f32[8,128], index: 0, kind: input, shape index: {}]
  %s1 = inlined_call_operand.hbm [shape: f32[8,128], index: 1, kind: output, shape index: {}]
  %s2 = sld [smem:[#allocation0]]
  $region18: #{tpu_custom_call.1} parent=0
    _
  %s4 = ssub.s32 1, %s2
  %s5 = scalar_select 0, %s4, %s2
  $region1: #{tpu_custom_call.1} parent=0
    #allocation2 [shape = 'u8[4096]{0}', space=vmem, size = 0x1000, scoped, tag = 'input window, operand 0, single buffered']
    #allocation3 [shape = 's32[1]{0}', space=sflag, size = 0x4, scoped, tag = 'scoped memory for tpu_custom_call.1']
    #allocation4 [shape = 's32[1]{0}', space=sflag, size = 0x4, scoped, tag = 'scoped memory for tpu_custom_call.1']
    #allocation5 [shape = 'u8[4096]{0}', space=vmem, size = 0x1000, scoped, tag = 'output window, operand 0, single buffered']
    %6 = vsyncpa [#allocation3], 0
    %7 = vsyncpa [#allocation4], 0
    // Predicated region
    $region2: #{tpu_custom_call.1} parent=1 // pred_check
      _
    $region3: #{tpu_custom_call.1} parent=1 // pred_check_branch
      %9 = sbr.rel (0) target = $region5
    $region4: #{tpu_custom_call.1} parent=1 // pred_region
      %s11 = ssub.s32 128, 128
      %12 = vsyncadd [#allocation3], %s11
      %s14 = sshll.u32 [#allocation2], 4
      %s15 = int_to_ptr.vmem [resolvable:$true] %s14
      %17 = dma.hbm_to_vmem [thread:$0]  %s0, 128, %s15, [#allocation3]
    $region5: #{tpu_custom_call.1} parent=1 // pred_fallthru
      _
    // Predicated region
    $region6: #{tpu_custom_call.1} parent=1 // pred_check
      _
    $region7: #{tpu_custom_call.1} parent=1 // pred_check_branch
      %19 = sbr.rel (0) target = $region9
    $region8: #{tpu_custom_call.1} parent=1 // pred_region
      %20 = dma.done [#allocation3], 128
    $region9: #{tpu_custom_call.1} parent=1 // pred_fallthru
      _
    %v21 = vld [vmem:[#allocation2] sm:$0xff]
    %22 = vst [vmem:[#allocation5] sm:$0xff] %v21
    // Predicated region
    $region10: #{tpu_custom_call.1} parent=1 // pred_check
      _
    $region11: #{tpu_custom_call.1} parent=1 // pred_check_branch
      %24 = sbr.rel (0) target = $region13
    $region12: #{tpu_custom_call.1} parent=1 // pred_region
      %s26 = ssub.s32 128, 128
      %27 = vsyncadd [#allocation4], %s26
      %s29 = sshll.u32 [#allocation5], 4
      %s30 = int_to_ptr.vmem [resolvable:$true] %s29
      %32 = dma.vmem_to_hbm [thread:$0]  %s30, 128, %s1, [#allocation4]
    $region13: #{tpu_custom_call.1} parent=1 // pred_fallthru
      _
    // Predicated region
    $region14: #{tpu_custom_call.1} parent=1 // pred_check
      _
    $region15: #{tpu_custom_call.1} parent=1 // pred_check_branch
      %34 = sbr.rel (0) target = $region17
    $region16: #{tpu_custom_call.1} parent=1 // pred_region
      %35 = dma.done [#allocation4], 128
    $region17: #{tpu_custom_call.1} parent=1 // pred_fallthru
      _
    %36 = vsyncpa [#allocation3], 1
    %37 = vsyncpa [#allocation4], 1

// kernel: tpu_custom_call.1
$region0: #{tpu_custom_call.1}
  #allocation0 [shape = 'u32[]', space=smem, size = 0x4, offset = 0x4, fixed_abs, tag = 'smem constant byte address 0x4 - core index']
  #allocation1 [shape = 'u32[144,128]{1,0:T(1,128)}', space=vmem, size = 0x12000, scoped, tag = 'internal scratch']
  #allocation2 [shape = 'f32[8,128]{1,0:T(8,128)}', space=vmem, size = 0x1000, scoped, tag = 'scratch operand']
  #allocation3 [shape = 'f32[8,128]{1,0:T(8,128)}', space=vmem, size = 0x1000, scoped, tag = 'scratch operand']
  %s0 = inlined_call_operand.hbm [shape: f32[16,128], index: 0, kind: input, shape index: {}]
  %s1 = inlined_call_operand.vmem [shape: f32[1,128], index: 1, kind: input, shape index: {}]
  %s2 = inlined_call_operand.vmem [shape: f32[1,128], index: 2, kind: input, shape index: {}]
  %s3 = inlined_call_operand.vmem [shape: f32[1,128], index: 3, kind: input, shape index: {}]
  %s4 = inlined_call_operand.hbm [shape: f32[128,128], index: 4, kind: input, shape index: {}]
  %s5 = inlined_call_operand.vmem [shape: f32[1,128], index: 5, kind: input, shape index: {}]
  %s6 = inlined_call_operand.hbm [shape: f32[128,128], index: 6, kind: input, shape index: {}]
  %s7 = inlined_call_operand.vmem [shape: f32[1,128], index: 7, kind: input, shape index: {}]
  %s8 = inlined_call_operand.hbm [shape: f32[16,128], index: 8, kind: output, shape index: {}]
  %s9 = sld [smem:[#allocation0]]
  $region85: #{tpu_custom_call.1} parent=0
    _
  %s11 = ssub.s32 1, %s9
  %s12 = scalar_select 0, %s11, %s9
  $region1: #{tpu_custom_call.1} parent=0
    #allocation4 [shape = 'u8[8192]{0}', space=vmem, size = 0x2000, scoped, tag = 'input window, operand 0']
    #allocation5 [shape = 's32[2]{0}', space=sflag, size = 0x8, scoped, tag = 'scoped memory for tpu_custom_call.1']
    #allocation6 [shape = 's32[2]{0}', space=sflag, size = 0x8, scoped, tag = 'scoped memory for tpu_custom_call.1']
    #allocation7 [shape = 'u8[65536]{0}', space=vmem, size = 0x10000, scoped, tag = 'input window, operand 4, single buffered']
    #allocation8 [shape = 's32[1]{0}', space=sflag, size = 0x4, scoped, tag = 'scoped memory for tpu_custom_call.1']
    #allocation9 [shape = 'u8[65536]{0}', space=vmem, size = 0x10000, scoped, tag = 'input window, operand 6, single buffered']
    #allocation10 [shape = 'u8[8192]{0}', space=vmem, size = 0x2000, scoped, tag = 'output window, operand 0']
    %13 = vsyncpa [#allocation5], 0
    %s14 = scalar_lea.sflag [#allocation5], 1
    %15 = vsyncpa %s14, 0
    %16 = vsyncpa [#allocation8], 0
    %17 = vsyncpa [#allocation6], 0
    %s18 = scalar_lea.sflag [#allocation6], 1
    %19 = vsyncpa %s18, 0
    loop: start=0, step=1, limit=4
    $region2: #{tpu_custom_call.1} parent=1 // loop_pre_header
      _
    $region3: #{tpu_custom_call.1} parent=1 // loop_header
      %s21 = sphi 0, %s25
      %p22 = scmp.ge.s32.totalorder %s21, 4
      %s28 = sphi 0, %s40
      %s29 = sphi 0, %s36
      %s30 = sphi 0, %s28
      %s31 = sphi 0, %s29
      %s32 = sphi 0, %s30
      %s33 = sphi 0, %s31
      %s43 = sphi 0, %s45
      %s46 = sphi 0, %s43
      %s47 = sphi 0, %s46
      %s63 = sphi 0, %s47
      %s67 = sphi 0, %s67
      %s69 = sphi 0, %s67
      %s70 = sphi 0, %s69
      %s84 = sphi 0, %s70
      %s88 = sphi 0, %s88
      %s90 = sphi 0, %s88
      %s91 = sphi 0, %s90
      %s105 = sphi 0, %s91
      %s109 = sphi 0, %s109
      %s111 = sphi 0, %s109
      %s112 = sphi 0, %s111
      %s126 = sphi 0, %s112
      %s132 = sphi 0, %s134
      %s135 = sphi 0, %s132
      %s136 = sphi 0, %s135
      %s152 = sphi 0, %s136
      %s158 = sphi 0, %s160
      %s161 = sphi 0, %s158
      %s162 = sphi 0, %s161
      %s178 = sphi 0, %s162
      %s184 = sphi 0, %s186
      %s187 = sphi 0, %s184
      %s188 = sphi 0, %s187
      %s204 = sphi 0, %s188
      %s208 = sphi 0, %s208
      %s210 = sphi 0, %s208
      %s211 = sphi 0, %s210
      %s225 = sphi 0, %s211
      %s231 = sphi 0, %s233
      %s234 = sphi 0, %s231
      %s235 = sphi 0, %s234
      %s251 = sphi 0, %s235
    $region4: #{tpu_custom_call.1} parent=1 // loop_header_branch
      %24 = sbr.rel (%p22) target = $region8
    $region5: #{tpu_custom_call.1} parent=1 // loop_body
      %s26 = ssub.s32 %s21, 1
      %s27 = ssub.s32 %s21, 2
      %s34 = sadd.s32 1, %s29
      %p35 = scmp.ge.s32.totalorder %s34, 1
      %s36 = scalar_select %p35, 0, %s34
      %s37 = sadd.s32 1, %s28
      %s38 = scalar_select %p35, %s37, %s28
      %p39 = scmp.ge.s32.totalorder %s38, 2
      %s40 = scalar_select %p39, 0, %s38
      %s41 = ssub.s32 %s28, %s40
      %p42 = scmp.eq.s32.totalorder %s41, 0
      %s44 = sadd.s32 %s43, 1
      %s45 = scalar_select %p42, %s43, %s44
      %p48 = pneg %p42
      %p49 = scmp.eq.s32.totalorder %s21, 1
      %p50 = por %p48, %p49
      %p51 = scmp.ne.s32.totalorder %s43, %s46
      %p52 = scmp.eq.s32.totalorder %s21, 0
      %p53 = por %p51, %p52
      %p54 = scmp.ne.s32.totalorder %s43, %s46
      %p55 = scmp.eq.s32.totalorder %s26, 1
      %p56 = por %p54, %p55
      %p57 = scmp.ne.s32.totalorder %s46, %s47
      %p58 = scmp.eq.s32.totalorder %s26, 0
      %p59 = por %p57, %p58
      %p60 = scmp.ne.s32.totalorder %s46, %s47
      %p61 = scmp.eq.s32.totalorder %s27, 1
      %p62 = por %p60, %p61
      %p64 = scmp.ne.s32.totalorder %s47, %s63
      %p65 = scmp.eq.s32.totalorder %s27, 0
      %p66 = por %p64, %p65
      %s68 = sadd.s32 %s67, 1
      %p71 = scmp.eq.s32.totalorder %s21, 1
      %p72 = scmp.ne.s32.totalorder %s67, %s69
      %p73 = scmp.eq.s32.totalorder %s21, 0
      %p74 = por %p72, %p73
      %p75 = scmp.ne.s32.totalorder %s67, %s69
      %p76 = scmp.eq.s32.totalorder %s26, 1
      %p77 = por %p75, %p76
      %p78 = scmp.ne.s32.totalorder %s69, %s70
      %p79 = scmp.eq.s32.totalorder %s26, 0
      %p80 = por %p78, %p79
      %p81 = scmp.ne.s32.totalorder %s69, %s70
      %p82 = scmp.eq.s32.totalorder %s27, 1
      %p83 = por %p81, %p82
      %p85 = scmp.ne.s32.totalorder %s70, %s84
      %p86 = scmp.eq.s32.totalorder %s27, 0
      %p87 = por %p85, %p86
      %s89 = sadd.s32 %s88, 1
      %p92 = scmp.eq.s32.totalorder %s21, 1
      %p93 = scmp.ne.s32.totalorder %s88, %s90
      %p94 = scmp.eq.s32.totalorder %s21, 0
      %p95 = por %p93, %p94
      %p96 = scmp.ne.s32.totalorder %s88, %s90
      %p97 = scmp.eq.s32.totalorder %s26, 1
      %p98 = por %p96, %p97
      %p99 = scmp.ne.s32.totalorder %s90, %s91
      %p100 = scmp.eq.s32.totalorder %s26, 0
      %p101 = por %p99, %p100
      %p102 = scmp.ne.s32.totalorder %s90, %s91
      %p103 = scmp.eq.s32.totalorder %s27, 1
      %p104 = por %p102, %p103
      %p106 = scmp.ne.s32.totalorder %s91, %s105
      %p107 = scmp.eq.s32.totalorder %s27, 0
      %p108 = por %p106, %p107
      %s110 = sadd.s32 %s109, 1
      %p113 = scmp.eq.s32.totalorder %s21, 1
      %p114 = scmp.ne.s32.totalorder %s109, %s111
      %p115 = scmp.eq.s32.totalorder %s21, 0
      %p116 = por %p114, %p115
      %p117 = scmp.ne.s32.totalorder %s109, %s111
      %p118 = scmp.eq.s32.totalorder %s26, 1
      %p119 = por %p117, %p118
      %p120 = scmp.ne.s32.totalorder %s111, %s112
      %p121 = scmp.eq.s32.totalorder %s26, 0
      %p122 = por %p120, %p121
      %p123 = scmp.ne.s32.totalorder %s111, %s112
      %p124 = scmp.eq.s32.totalorder %s27, 1
      %p125 = por %p123, %p124
      %p127 = scmp.ne.s32.totalorder %s112, %s126
      %p128 = scmp.eq.s32.totalorder %s27, 0
      %p129 = por %p127, %p128
      %s130 = ssub.s32 %s29, %s36
      %p131 = scmp.eq.s32.totalorder %s130, 0
      %s133 = sadd.s32 %s132, 1
      %s134 = scalar_select %p131, %s132, %s133
      %p137 = pneg %p131
      %p138 = scmp.eq.s32.totalorder %s21, 1
      %p139 = por %p137, %p138
      %p140 = scmp.ne.s32.totalorder %s132, %s135
      %p141 = scmp.eq.s32.totalorder %s21, 0
      %p142 = por %p140, %p141
      %p143 = scmp.ne.s32.totalorder %s132, %s135
      %p144 = scmp.eq.s32.totalorder %s26, 1
      %p145 = por %p143, %p144
      %p146 = scmp.ne.s32.totalorder %s135, %s136
      %p147 = scmp.eq.s32.totalorder %s26, 0
      %p148 = por %p146, %p147
      %p149 = scmp.ne.s32.totalorder %s135, %s136
      %p150 = scmp.eq.s32.totalorder %s27, 1
      %p151 = por %p149, %p150
      %p153 = scmp.ne.s32.totalorder %s136, %s152
      %p154 = scmp.eq.s32.totalorder %s27, 0
      %p155 = por %p153, %p154
      %s156 = ssub.s32 %s29, %s36
      %p157 = scmp.eq.s32.totalorder %s156, 0
      %s159 = sadd.s32 %s158, 1
      %s160 = scalar_select %p157, %s158, %s159
      %p163 = pneg %p157
      %p164 = scmp.eq.s32.totalorder %s21, 1
      %p165 = por %p163, %p164
      %p166 = scmp.ne.s32.totalorder %s158, %s161
      %p167 = scmp.eq.s32.totalorder %s21, 0
      %p168 = por %p166, %p167
      %p169 = scmp.ne.s32.totalorder %s158, %s161
      %p170 = scmp.eq.s32.totalorder %s26, 1
      %p171 = por %p169, %p170
      %p172 = scmp.ne.s32.totalorder %s161, %s162
      %p173 = scmp.eq.s32.totalorder %s26, 0
      %p174 = por %p172, %p173
      %p175 = scmp.ne.s32.totalorder %s161, %s162
      %p176 = scmp.eq.s32.totalorder %s27, 1
      %p177 = por %p175, %p176
      %p179 = scmp.ne.s32.totalorder %s162, %s178
      %p180 = scmp.eq.s32.totalorder %s27, 0
      %p181 = por %p179, %p180
      %s182 = ssub.s32 %s29, %s36
      %p183 = scmp.eq.s32.totalorder %s182, 0
      %s185 = sadd.s32 %s184, 1
      %s186 = scalar_select %p183, %s184, %s185
      %p189 = pneg %p183
      %p190 = scmp.eq.s32.totalorder %s21, 1
      %p191 = por %p189, %p190
      %p192 = scmp.ne.s32.totalorder %s184, %s187
      %p193 = scmp.eq.s32.totalorder %s21, 0
      %p194 = por %p192, %p193
      %p195 = scmp.ne.s32.totalorder %s184, %s187
      %p196 = scmp.eq.s32.totalorder %s26, 1
      %p197 = por %p195, %p196
      %p198 = scmp.ne.s32.totalorder %s187, %s188
      %p199 = scmp.eq.s32.totalorder %s26, 0
      %p200 = por %p198, %p199
      %p201 = scmp.ne.s32.totalorder %s187, %s188
      %p202 = scmp.eq.s32.totalorder %s27, 1
      %p203 = por %p201, %p202
      %p205 = scmp.ne.s32.totalorder %s188, %s204
      %p206 = scmp.eq.s32.totalorder %s27, 0
      %p207 = por %p205, %p206
      %s209 = sadd.s32 %s208, 1
      %p212 = scmp.eq.s32.totalorder %s21, 1
      %p213 = scmp.ne.s32.totalorder %s208, %s210
      %p214 = scmp.eq.s32.totalorder %s21, 0
      %p215 = por %p213, %p214
      %p216 = scmp.ne.s32.totalorder %s208, %s210
      %p217 = scmp.eq.s32.totalorder %s26, 1
      %p218 = por %p216, %p217
      %p219 = scmp.ne.s32.totalorder %s210, %s211
      %p220 = scmp.eq.s32.totalorder %s26, 0
      %p221 = por %p219, %p220
      %p222 = scmp.ne.s32.totalorder %s210, %s211
      %p223 = scmp.eq.s32.totalorder %s27, 1
      %p224 = por %p222, %p223
      %p226 = scmp.ne.s32.totalorder %s211, %s225
      %p227 = scmp.eq.s32.totalorder %s27, 0
      %p228 = por %p226, %p227
      %s229 = ssub.s32 %s28, %s40
      %p230 = scmp.eq.s32.totalorder %s229, 0
      %s232 = sadd.s32 %s231, 1
      %s233 = scalar_select %p230, %s231, %s232
      %p236 = pneg %p230
      %p237 = scmp.eq.s32.totalorder %s21, 1
      %p238 = por %p236, %p237
      %p239 = scmp.ne.s32.totalorder %s231, %s234
      %p240 = scmp.eq.s32.totalorder %s21, 0
      %p241 = por %p239, %p240
      %p242 = scmp.ne.s32.totalorder %s231, %s234
      %p243 = scmp.eq.s32.totalorder %s26, 1
      %p244 = por %p242, %p243
      %p245 = scmp.ne.s32.totalorder %s234, %s235
      %p246 = scmp.eq.s32.totalorder %s26, 0
      %p247 = por %p245, %p246
      %p248 = scmp.ne.s32.totalorder %s234, %s235
      %p249 = scmp.eq.s32.totalorder %s27, 1
      %p250 = por %p248, %p249
      %p252 = scmp.ne.s32.totalorder %s235, %s251
      %p253 = scmp.eq.s32.totalorder %s27, 0
      %p254 = por %p252, %p253
      %p255 = scmp.le.s32.totalorder 1, %s21
      %p256 = scmp.lt.s32.totalorder %s21, 3
      %p257 = pnand %p255, %p256
      %p258 = pneg %p257
      // Predicated region
      $region9: #{tpu_custom_call.1} parent=5 // pred_check
        _
      $region10: #{tpu_custom_call.1} parent=5 // pred_check_branch
        %260 = sbr.rel (%p257) target = $region12
      $region11: #{tpu_custom_call.1} parent=5 // pred_region
        %s261 = ssub.s32 %s21, 1
        // Predicated region
        $region13: #{tpu_custom_call.1} parent=11 // pred_check
          %p262 = pneg %p80
        $region14: #{tpu_custom_call.1} parent=11 // pred_check_branch
          %264 = sbr.rel (%p262) target = $region16
        $region15: #{tpu_custom_call.1} parent=11 // pred_region
          _
        $region16: #{tpu_custom_call.1} parent=11 // pred_fallthru
          _
        // Predicated region
        $region17: #{tpu_custom_call.1} parent=11 // pred_check
          %p265 = pneg %p101
        $region18: #{tpu_custom_call.1} parent=11 // pred_check_branch
          %267 = sbr.rel (%p265) target = $region20
        $region19: #{tpu_custom_call.1} parent=11 // pred_region
          _
        $region20: #{tpu_custom_call.1} parent=11 // pred_fallthru
          _
        // Predicated region
        $region21: #{tpu_custom_call.1} parent=11 // pred_check
          %p268 = pneg %p122
        $region22: #{tpu_custom_call.1} parent=11 // pred_check_branch
          %270 = sbr.rel (%p268) target = $region24
        $region23: #{tpu_custom_call.1} parent=11 // pred_region
          _
        $region24: #{tpu_custom_call.1} parent=11 // pred_fallthru
          _
        // Predicated region
        $region25: #{tpu_custom_call.1} parent=11 // pred_check
          %p271 = pneg %p148
        $region26: #{tpu_custom_call.1} parent=11 // pred_check_branch
          %273 = sbr.rel (%p271) target = $region28
        $region27: #{tpu_custom_call.1} parent=11 // pred_region
          %s275 = ssub.s32 2048, 2048
          %276 = vsyncadd [#allocation8], %s275
          %s277 = smul.addr %s31, 128
          %s278 = scalar_lea.hbm %s4, %s277
          %s279 = sshll.u32 [#allocation7], 4
          %s280 = int_to_ptr.vmem [resolvable:$true] %s279
          %285 = dma.hbm_to_vmem [thread:$0]  %s278, 2048, %s280, [#allocation8], 128, 128, 8
        $region28: #{tpu_custom_call.1} parent=11 // pred_fallthru
          _
        // Predicated region
        $region29: #{tpu_custom_call.1} parent=11 // pred_check
          %p286 = pneg %p174
        $region30: #{tpu_custom_call.1} parent=11 // pred_check_branch
          %288 = sbr.rel (%p286) target = $region32
        $region31: #{tpu_custom_call.1} parent=11 // pred_region
          %p289 = scmp.lt.s32.totalorder %s31, 0
          %s290 = scalar_select %p289, %s31, 0
          %s291 = scalar_lea.vmem %s5, %s290
        $region32: #{tpu_custom_call.1} parent=11 // pred_fallthru
          _
        // Predicated region
        $region33: #{tpu_custom_call.1} parent=11 // pred_check
          %p292 = pneg %p200
        $region34: #{tpu_custom_call.1} parent=11 // pred_check_branch
          %294 = sbr.rel (%p292) target = $region36
        $region35: #{tpu_custom_call.1} parent=11 // pred_region
          %s295 = smul.u32 16, %s31
          %s297 = ssub.s32 2048, 2048
          %298 = vsyncadd [#allocation8], %s297
          %s299 = smul.addr %s295, 128
          %s300 = scalar_lea.hbm %s6, %s299
          %s301 = sshll.u32 [#allocation9], 4
          %s302 = int_to_ptr.vmem [resolvable:$true] %s301
          %307 = dma.hbm_to_vmem [thread:$0]  %s300, 2048, %s302, [#allocation8], 128, 128, 8
        $region36: #{tpu_custom_call.1} parent=11 // pred_fallthru
          _
        // Predicated region
        $region37: #{tpu_custom_call.1} parent=11 // pred_check
          %p308 = pneg %p221
        $region38: #{tpu_custom_call.1} parent=11 // pred_check_branch
          %310 = sbr.rel (%p308) target = $region40
        $region39: #{tpu_custom_call.1} parent=11 // pred_region
          _
        $region40: #{tpu_custom_call.1} parent=11 // pred_fallthru
          _
      $region12: #{tpu_custom_call.1} parent=5 // pred_fallthru
        _
      %p311 = scmp.lt.s32.totalorder %s21, 2
      // Predicated region
      $region41: #{tpu_custom_call.1} parent=5 // pred_check
        %p312 = pneg %p311
      $region42: #{tpu_custom_call.1} parent=5 // pred_check_branch
        %314 = sbr.rel (%p312) target = $region44
      $region43: #{tpu_custom_call.1} parent=5 // pred_region
        // Predicated region
        $region45: #{tpu_custom_call.1} parent=43 // pred_check
          %p315 = pneg %p53
        $region46: #{tpu_custom_call.1} parent=43 // pred_check_branch
          %317 = sbr.rel (%p315) target = $region48
        $region47: #{tpu_custom_call.1} parent=43 // pred_region
          %s318 = sand.u32 %s43, 1
          %s319 = scalar_lea.sflag [#allocation5], %s318
          %s320 = sand.u32 %s43, 1
          %s321 = smul.addr %s320, 8
          %s322 = scalar_lea.vmem [#allocation4], %s321
          %s324 = ssub.s32 128, 128
          %325 = vsyncadd %s319, %s324
          %s326 = smul.addr %s28, 128
          %s327 = scalar_lea.hbm %s0, %s326
          %s329 = sshll.u32 %s322, 4
          %s330 = int_to_ptr.vmem [resolvable:$true] %s329
          %332 = dma.hbm_to_vmem [thread:$0]  %s327, 128, %s330, %s319
        $region48: #{tpu_custom_call.1} parent=43 // pred_fallthru
          _
      $region44: #{tpu_custom_call.1} parent=5 // pred_fallthru
        _
      %p333 = scmp.le.s32.totalorder 1, %s21
      %p334 = scmp.lt.s32.totalorder %s21, 3
      %p335 = pnand %p333, %p334
      %p336 = pneg %p335
      // Predicated region
      $region49: #{tpu_custom_call.1} parent=5 // pred_check
        _
      $region50: #{tpu_custom_call.1} parent=5 // pred_check_branch
        %338 = sbr.rel (%p335) target = $region52
      $region51: #{tpu_custom_call.1} parent=5 // pred_region
        %s339 = ssub.s32 %s21, 1
        %s340 = sand.u32 %s46, 1
        %s341 = scalar_lea.sflag [#allocation5], %s340
        %s342 = sand.u32 %s46, 1
        %s343 = smul.addr %s342, 8
        %s344 = scalar_lea.vmem [#allocation4], %s343
        // Predicated region
        $region53: #{tpu_custom_call.1} parent=51 // pred_check
          %p345 = pneg %p59
        $region54: #{tpu_custom_call.1} parent=51 // pred_check_branch
          %347 = sbr.rel (%p345) target = $region56
        $region55: #{tpu_custom_call.1} parent=51 // pred_region
          %348 = dma.done %s341, 128
        $region56: #{tpu_custom_call.1} parent=51 // pred_fallthru
          _
        // Predicated region
        $region57: #{tpu_custom_call.1} parent=51 // pred_check
          %p349 = pneg %p148
        $region58: #{tpu_custom_call.1} parent=51 // pred_check_branch
          %351 = sbr.rel (%p349) target = $region60
        $region59: #{tpu_custom_call.1} parent=51 // pred_region
          %352 = dma.done [#allocation8], 2048
        $region60: #{tpu_custom_call.1} parent=51 // pred_fallthru
          _
        // Predicated region
        $region61: #{tpu_custom_call.1} parent=51 // pred_check
          %p353 = pneg %p200
        $region62: #{tpu_custom_call.1} parent=51 // pred_check_branch
          %355 = sbr.rel (%p353) target = $region64
        $region63: #{tpu_custom_call.1} parent=51 // pred_region
          %356 = dma.done [#allocation8], 2048
        $region64: #{tpu_custom_call.1} parent=51 // pred_fallthru
          _
        %s357 = sand.u32 %s46, 1
        %s358 = scalar_lea.sflag [#allocation5], %s357
        %s359 = sand.u32 %s46, 1
        %s360 = smul.addr %s359, 8
        %s361 = scalar_lea.vmem [#allocation4], %s360
        %p362 = pneg %p59
        %p363 = pneg %p56
        %p364 = pneg %p80
        %p365 = pneg %p77
        %p366 = pneg %p101
        %p367 = pneg %p98
        %p368 = pneg %p122
        %p369 = pneg %p119
        %p370 = pneg %p148
        %p371 = pneg %p145
        %p372 = scmp.lt.s32.totalorder %s31, 0
        %s373 = scalar_select %p372, %s31, 0
        %s374 = scalar_lea.vmem %s5, %s373
        %p375 = pneg %p174
        %p376 = pneg %p171
        %p377 = pneg %p200
        %p378 = pneg %p197
        %p379 = pneg %p221
        %p380 = pneg %p218
        %p381 = pneg %p247
        %p382 = pneg %p244
        %s383 = sand.u32 %s234, 1
        %s384 = scalar_lea.sflag [#allocation6], %s383
        %s385 = sand.u32 %s234, 1
        %s386 = smul.addr %s385, 8
        %s387 = scalar_lea.vmem [#allocation10], %s386
        %p388 = scmp.lt.s32.totalorder %s31, 0
        %s389 = scalar_select %p388, %s31, 0
        %s390 = scalar_lea.vmem %s5, %s389
        %s391 = smul.u32 16, %s31
        %p392 = scmp.eq.s32.totalorder %s31, 0
        // Predicated region
        $region65: #{tpu_custom_call.1} parent=51 // pred_check
          %p393 = pneg %p392
        $region66: #{tpu_custom_call.1} parent=51 // pred_check_branch
          %395 = sbr.rel (%p393) target = $region68
        $region67: #{tpu_custom_call.1} parent=51 // pred_region
          %v396 = vld [vmem:[%s344] sm:$0xff]
          %397 = vadd.xlane.f32.xlu0 %v396
          %v398 = vpop.xlane.xlu0 %397
          %v399 = vmul.f32 %v398, 0.03125
          %v400 = vsub.f32 %v396, %v399
          %v401 = vld [vmem:[%s3] sm:$0x1]
          %v403 = vlaneseq
          %v404 = vshrl.u32 %v403, 7
          %v405 = vsub.s32 0, %v404
          %v406 = vrot.slane %v401, %v405
          %v408 = vmul.f32 %v400, %v406
          %v409 = vmul.f32 %v408, %v408
          %410 = vadd.xlane.f32.xlu0 %v409
          %v411 = vpop.xlane.xlu0 %410
          %v412 = vmul.f32 %v411, 0.03125
          %v413 = vadd.f32 %v412, 1e-05
          %v414 = vrsqrt.pop %v413
          %v415 = vmul.f32 %v408, %v414
          %v416 = vld [vmem:[%s1] sm:$0x1]
          %v418 = vlaneseq
          %v419 = vshrl.u32 %v418, 7
          %v420 = vsub.s32 0, %v419
          %v421 = vrot.slane %v416, %v420
          %v423 = vmul.f32 %v415, %v421
          %v424 = vld [vmem:[%s2] sm:$0x1]
          %v426 = vlaneseq
          %v427 = vshrl.u32 %v426, 7
          %v428 = vsub.s32 0, %v427
          %v429 = vrot.slane %v424, %v428
          %v431 = vadd.f32 %v423, %v429
          %432 = vst [vmem:[#allocation2] sm:$0xff] %v431
          %v433 = vld [vmem:[%s7] sm:$0x1]
          %v435 = vlaneseq
          %v436 = vshrl.u32 %v435, 7
          %v437 = vsub.s32 0, %v436
          %v438 = vrot.slane %v433, %v437
          %v440 = vadd.f32 %v396, %v438
          %441 = vst [vmem:[#allocation3] sm:$0xff] %v440
        $region68: #{tpu_custom_call.1} parent=51 // pred_fallthru
          _
        %v442 = vld [vmem:[#allocation2] sm:$0xff]
        %v443 = vld [vmem:[#allocation7] sm:$0xff]
        %v444 = vld [vmem:[#allocation7 + $0x8] sm:$0xff]
        %v445 = vld [vmem:[#allocation7 + $0x10] sm:$0xff]
        %v446 = vld [vmem:[#allocation7 + $0x18] sm:$0xff]
        %v447 = vld [vmem:[#allocation7 + $0x20] sm:$0xff]
        %v448 = vld [vmem:[#allocation7 + $0x28] sm:$0xff]
        %v449 = vld [vmem:[#allocation7 + $0x30] sm:$0xff]
        %v450 = vld [vmem:[#allocation7 + $0x38] sm:$0xff]
        %v451 = vld [vmem:[#allocation7 + $0x40] sm:$0xff]
        %v452 = vld [vmem:[#allocation7 + $0x48] sm:$0xff]
        %v453 = vld [vmem:[#allocation7 + $0x50] sm:$0xff]
        %v454 = vld [vmem:[#allocation7 + $0x58] sm:$0xff]
        %v455 = vld [vmem:[#allocation7 + $0x60] sm:$0xff]
        %v456 = vld [vmem:[#allocation7 + $0x68] sm:$0xff]
        %v457 = vld [vmem:[#allocation7 + $0x70] sm:$0xff]
        %v458 = vld [vmem:[#allocation7 + $0x78] sm:$0xff]
        %v459 = vld [vmem:[%s390] sm:$0x1]
        %v461 = vlaneseq
        %v462 = vshrl.u32 %v461, 7
        %v463 = vsub.s32 0, %v462
        %v464 = vrot.slane %v459, %v463
        %466 = vmatprep.subr.mxu0 0.0
        %467 = vmatpush1.msra.mxu0 %v443
        %468 = vmatprep.subr.mxu0 0.0
        %469 = vmatpush1.msra.mxu0 %v444
        %470 = vmatprep.subr.mxu0 0.0
        %471 = vmatpush1.msra.mxu0 %v445
        %472 = vmatprep.subr.mxu0 0.0
        %473 = vmatpush1.msra.mxu0 %v446
        %474 = vmatprep.subr.mxu0 0.0
        %475 = vmatpush1.msra.mxu0 %v447
        %476 = vmatprep.subr.mxu0 0.0
        %477 = vmatpush1.msra.mxu0 %v448
        %478 = vmatprep.subr.mxu0 0.0
        %479 = vmatpush1.msra.mxu0 %v449
        %480 = vmatprep.subr.mxu0 0.0
        %481 = vmatpush1.msra.mxu0 %v450
        %482 = vmatprep.subr.mxu0 0.0
        %483 = vmatpush1.msra.mxu0 %v451
        %484 = vmatprep.subr.mxu0 0.0
        %485 = vmatpush1.msra.mxu0 %v452
        %486 = vmatprep.subr.mxu0 0.0
        %487 = vmatpush1.msra.mxu0 %v453
        %488 = vmatprep.subr.mxu0 0.0
        %489 = vmatpush1.msra.mxu0 %v454
        %490 = vmatprep.subr.mxu0 0.0
        %491 = vmatpush1.msra.mxu0 %v455
        %492 = vmatprep.subr.mxu0 0.0
        %493 = vmatpush1.msra.mxu0 %v456
        %494 = vmatprep.subr.mxu0 0.0
        %495 = vmatpush1.msra.mxu0 %v457
        %496 = vmatprep.subr.mxu0 0.0
        %497 = vmatpush1.msra.mxu0 %v458
        %498 = vmatprep.subr.mxu0 0.0
        %499 = vmatpush1.msra.mxu0 0.0
        %500 = vmatprep.subr.mxu0 0.0
        %501 = vmatpush1.msra.mxu0 0.0
        %502 = vmatprep.subr.mxu0 0.0
        %503 = vmatpush1.msra.mxu0 0.0
        %504 = vmatprep.subr.mxu0 0.0
        %505 = vmatpush1.msra.mxu0 0.0
        %506 = vmatprep.subr.mxu0 0.0
        %507 = vmatpush1.msra.mxu0 0.0
        %508 = vmatprep.subr.mxu0 0.0
        %509 = vmatpush1.msra.mxu0 0.0
        %510 = vmatprep.subr.mxu0 0.0
        %511 = vmatpush1.msra.mxu0 0.0
        %512 = vmatprep.subr.mxu0 0.0
        %513 = vmatpush1.msra.mxu0 0.0
        %514 = vmatprep.subr.mxu0 0.0
        %515 = vmatpush1.msra.mxu0 0.0
        %516 = vmatprep.subr.mxu0 0.0
        %517 = vmatpush1.msra.mxu0 0.0
        %518 = vmatprep.subr.mxu0 0.0
        %519 = vmatpush1.msra.mxu0 0.0
        %520 = vmatprep.subr.mxu0 0.0
        %521 = vmatpush1.msra.mxu0 0.0
        %522 = vmatprep.subr.mxu0 0.0
        %523 = vmatpush1.msra.mxu0 0.0
        %524 = vmatprep.subr.mxu0 0.0
        %525 = vmatpush1.msra.mxu0 0.0
        %526 = vmatprep.subr.mxu0 0.0
        %527 = vmatpush1.msra.mxu0 0.0
        %528 = vmatprep.subr.mxu0 0.0
        %529 = vmatpush1.msra.mxu0 0.0
        %530 = vmatprep.mubr.f32.mxu0 0.0
        %531 = vmatmul.mubr.f32.gmra.mrb[0].mxu0 %v442
        %v532 = vpop.f32.mrb[0].mxu0
        %v533 = vadd.f32 %v464, %v532
        %v534 = vpop.f32.mrb[0].mxu0
        %535 = vdwg.mxu0
        %v536 = vmul.f32 %v533, 0.5
        %v537 = vmul.f32 %v533, 0.70710677
        %v538 = verf.f32.pop %v537
        %v539 = vadd.f32 %v538, 1.0
        %v540 = vmul.f32 %v536, %v539
        %v541 = vld [vmem:[#allocation3] sm:$0xff]
        %v542 = vld [vmem:[#allocation9] sm:$0xff]
        %v543 = vld [vmem:[#allocation9 + $0x8] sm:$0xff]
        %v544 = vld [vmem:[#allocation9 + $0x10] sm:$0xff]
        %v545 = vld [vmem:[#allocation9 + $0x18] sm:$0xff]
        %v546 = vld [vmem:[#allocation9 + $0x20] sm:$0xff]
        %v547 = vld [vmem:[#allocation9 + $0x28] sm:$0xff]
        %v548 = vld [vmem:[#allocation9 + $0x30] sm:$0xff]
        %v549 = vld [vmem:[#allocation9 + $0x38] sm:$0xff]
        %v550 = vld [vmem:[#allocation9 + $0x40] sm:$0xff]
        %v551 = vld [vmem:[#allocation9 + $0x48] sm:$0xff]
        %v552 = vld [vmem:[#allocation9 + $0x50] sm:$0xff]
        %v553 = vld [vmem:[#allocation9 + $0x58] sm:$0xff]
        %v554 = vld [vmem:[#allocation9 + $0x60] sm:$0xff]
        %v555 = vld [vmem:[#allocation9 + $0x68] sm:$0xff]
        %v556 = vld [vmem:[#allocation9 + $0x70] sm:$0xff]
        %v557 = vld [vmem:[#allocation9 + $0x78] sm:$0xff]
        %558 = vmatprep.subr.mxu0 0.0
        %559 = vmatpush1.msra.mxu0 %v542
        %560 = vmatprep.subr.mxu0 0.0
        %561 = vmatpush1.msra.mxu0 %v543
        %562 = vmatprep.subr.mxu0 0.0
        %563 = vmatpush1.msra.mxu0 %v544
        %564 = vmatprep.subr.mxu0 0.0
        %565 = vmatpush1.msra.mxu0 %v545
        %566 = vmatprep.subr.mxu0 0.0
        %567 = vmatpush1.msra.mxu0 %v546
        %568 = vmatprep.subr.mxu0 0.0
        %569 = vmatpush1.msra.mxu0 %v547
        %570 = vmatprep.subr.mxu0 0.0
        %571 = vmatpush1.msra.mxu0 %v548
        %572 = vmatprep.subr.mxu0 0.0
        %573 = vmatpush1.msra.mxu0 %v549
        %574 = vmatprep.subr.mxu0 0.0
        %575 = vmatpush1.msra.mxu0 %v550
        %576 = vmatprep.subr.mxu0 0.0
        %577 = vmatpush1.msra.mxu0 %v551
        %578 = vmatprep.subr.mxu0 0.0
        %579 = vmatpush1.msra.mxu0 %v552
        %580 = vmatprep.subr.mxu0 0.0
        %581 = vmatpush1.msra.mxu0 %v553
        %582 = vmatprep.subr.mxu0 0.0
        %583 = vmatpush1.msra.mxu0 %v554
        %584 = vmatprep.subr.mxu0 0.0
        %585 = vmatpush1.msra.mxu0 %v555
        %586 = vmatprep.subr.mxu0 0.0
        %587 = vmatpush1.msra.mxu0 %v556
        %588 = vmatprep.subr.mxu0 0.0
        %589 = vmatpush1.msra.mxu0 %v557
        %590 = vmatprep.subr.mxu0 0.0
        %591 = vmatpush1.msra.mxu0 0.0
        %592 = vmatprep.subr.mxu0 0.0
        %593 = vmatpush1.msra.mxu0 0.0
        %594 = vmatprep.subr.mxu0 0.0
        %595 = vmatpush1.msra.mxu0 0.0
        %596 = vmatprep.subr.mxu0 0.0
        %597 = vmatpush1.msra.mxu0 0.0
        %598 = vmatprep.subr.mxu0 0.0
        %599 = vmatpush1.msra.mxu0 0.0
        %600 = vmatprep.subr.mxu0 0.0
        %601 = vmatpush1.msra.mxu0 0.0
        %602 = vmatprep.subr.mxu0 0.0
        %603 = vmatpush1.msra.mxu0 0.0
        %604 = vmatprep.subr.mxu0 0.0
        %605 = vmatpush1.msra.mxu0 0.0
        %606 = vmatprep.subr.mxu0 0.0
        %607 = vmatpush1.msra.mxu0 0.0
        %608 = vmatprep.subr.mxu0 0.0
        %609 = vmatpush1.msra.mxu0 0.0
        %610 = vmatprep.subr.mxu0 0.0
        %611 = vmatpush1.msra.mxu0 0.0
        %612 = vmatprep.subr.mxu0 0.0
        %613 = vmatpush1.msra.mxu0 0.0
        %614 = vmatprep.subr.mxu0 0.0
        %615 = vmatpush1.msra.mxu0 0.0
        %616 = vmatprep.subr.mxu0 0.0
        %617 = vmatpush1.msra.mxu0 0.0
        %618 = vmatprep.subr.mxu0 0.0
        %619 = vmatpush1.msra.mxu0 0.0
        %620 = vmatprep.subr.mxu0 0.0
        %621 = vmatpush1.msra.mxu0 0.0
        %622 = vmatprep.mubr.f32.mxu0 0.0
        %623 = vmatmul.mubr.f32.gmra.mrb[0].mxu0 %v540
        %v624 = vpop.f32.mrb[0].mxu0
        %v625 = vadd.f32 0.0, %v624
        %v626 = vpop.f32.mrb[0].mxu0
        %627 = vdwg.mxu0
        %v628 = vadd.f32 %v541, %v625
        %629 = vst [vmem:[#allocation3] sm:$0xff] %v628
        // Predicated region
        $region69: #{tpu_custom_call.1} parent=51 // pred_check
          %p630 = pneg %p392
        $region70: #{tpu_custom_call.1} parent=51 // pred_check_branch
          %632 = sbr.rel (%p630) target = $region72
        $region71: #{tpu_custom_call.1} parent=51 // pred_region
          %v633 = vld [vmem:[#allocation3] sm:$0xff]
          %634 = vst [vmem:[%s387] sm:$0xff] %v633
        $region72: #{tpu_custom_call.1} parent=51 // pred_fallthru
          _
        %s635 = sand.u32 %s234, 1
        %s636 = scalar_lea.sflag [#allocation6], %s635
        %s637 = sand.u32 %s234, 1
        %s638 = smul.addr %s637, 8
        %s639 = scalar_lea.vmem [#allocation10], %s638
        // Predicated region
        $region73: #{tpu_custom_call.1} parent=51 // pred_check
          %p640 = pneg %p244
        $region74: #{tpu_custom_call.1} parent=51 // pred_check_branch
          %642 = sbr.rel (%p640) target = $region76
        $region75: #{tpu_custom_call.1} parent=51 // pred_region
          %s644 = ssub.s32 128, 128
          %645 = vsyncadd %s636, %s644
          %s646 = smul.addr %s30, 128
          %s647 = scalar_lea.hbm %s8, %s646
          %s649 = sshll.u32 %s639, 4
          %s650 = int_to_ptr.vmem [resolvable:$true] %s649
          %652 = dma.vmem_to_hbm [thread:$0]  %s650, 128, %s647, %s636
        $region76: #{tpu_custom_call.1} parent=51 // pred_fallthru
          _
      $region52: #{tpu_custom_call.1} parent=5 // pred_fallthru
        _
      %p653 = scmp.le.s32.totalorder 2, %s21
      // Predicated region
      $region77: #{tpu_custom_call.1} parent=5 // pred_check
        %p654 = pneg %p653
      $region78: #{tpu_custom_call.1} parent=5 // pred_check_branch
        %656 = sbr.rel (%p654) target = $region80
      $region79: #{tpu_custom_call.1} parent=5 // pred_region
        %s657 = ssub.s32 %s21, 2
        // Predicated region
        $region81: #{tpu_custom_call.1} parent=79 // pred_check
          %p658 = pneg %p250
        $region82: #{tpu_custom_call.1} parent=79 // pred_check_branch
          %660 = sbr.rel (%p658) target = $region84
        $region83: #{tpu_custom_call.1} parent=79 // pred_region
          %s661 = sand.u32 %s235, 1
          %s662 = scalar_lea.sflag [#allocation6], %s661
          %s663 = sand.u32 %s235, 1
          %s664 = smul.addr %s663, 8
          %s665 = scalar_lea.vmem [#allocation10], %s664
          %666 = dma.done %s662, 128
        $region84: #{tpu_custom_call.1} parent=79 // pred_fallthru
          _
      $region80: #{tpu_custom_call.1} parent=5 // pred_fallthru
        _
    $region6: #{tpu_custom_call.1} parent=1 // loop_footer
      %s25 = sadd.s32 1, %s21
    $region7: #{tpu_custom_call.1} parent=1 // loop_footer_branch
      %20 = sbr.rel target = $region3
    $region8: #{tpu_custom_call.1} parent=1 // loop_exit
      _
    %667 = vsyncpa [#allocation5], 1
    %s668 = scalar_lea.sflag [#allocation5], 1
    %669 = vsyncpa %s668, 1
    %670 = vsyncpa [#allocation8], 1
    %671 = vsyncpa [#allocation6], 1
    %s672 = scalar_lea.sflag [#allocation6], 1
    %673 = vsyncpa %s672, 1

</llo_original>
